<compile_context>
chip_gen: v6e
topology: v6e:2x2x1
jax: 0.10.0
libtpu: 0.0.40
codegen_flags: <defaults>
</compile_context>

<pallas_src>
import functools

import jax
import jax.numpy as jnp
from jax import lax
from jax.experimental import pallas as pl
from jax.experimental.pallas import tpu as pltpu

NUM_FEATURES = 13
LAYER_SIZES = [NUM_FEATURES, 64, 32, 16, 8, 4, 2]

# --- packed-operand layout constants (shared by wrapper packer and kernel) -------
# Bias slab: all six biases stacked along sublanes, each layer 8-row aligned.
_B_OFF = []
_off = 0
for _n in LAYER_SIZES[1:]:
    _B_OFF.append(_off)
    _off += _n + ((-_n) % 8)
_B_ROWS = _off                                   # 136

# Tail-weight slab: fc4 | fc5 | fc6 packed along lanes, padded to 8 sublanes.
_TAIL_SIZES = LAYER_SIZES[3:]                    # [16, 8, 4, 2]
_WT_OFF = []
_off = 0
for _d in _TAIL_SIZES[:-1]:
    _WT_OFF.append(_off)
    _off += _d
_WT_COLS = _off                                  # 28
_WT_ROWS = _TAIL_SIZES[1]                        # 8 (largest tail out-dim)


def census_mlp_kernel(x_ref, w1_ref, w2_ref, w3_ref, wt_ref, b_ref, o_ref):
    """One batch tile of the fused 6-layer MLP.

    x tile:   (TB, 13) f32   raw features; bf16 cast + transpose fused here
    w1/w2/w3: bf16 torch layout (out, in), VMEM-resident for the whole grid
    wt:       (8, 28) f32    fc4 | fc5 | fc6 packed along lanes
    b:        (136, 1) f32   all biases, 8-row-aligned per layer
    output:   (2, TB) f32    lane-dense store (batch on the 128-lane axis)
    """
    xb = x_ref[...].astype(jnp.bfloat16)         # (TB, 13) bf16
    ball = b_ref[...]                            # (136, 1) f32
    wt = wt_ref[...]                             # (8, 28)  f32

    def mxu_layer(h_in, w, b, trans_rhs=False):
        # MXU matmul with f32 accumulation; bias add / ReLU stay in f32.
        if trans_rhs:
            # (out, K) x (TB, K)^T -> (out, TB): folds the batch-on-lanes
            # transpose of x into the contraction (NT pattern, like q @ k^T).
            acc = lax.dot_general(w, h_in, (((1,), (1,)), ((), ())),
                                  preferred_element_type=jnp.float32)
        else:
            acc = jnp.dot(w, h_in, preferred_element_type=jnp.float32)
        return jnp.maximum(acc + b, 0.0)

    # fc1 / fc2 / fc3 on the MXU (bf16 inputs, f32 accumulate).
    h = mxu_layer(xb, w1_ref[...],
                  ball[_B_OFF[0]:_B_OFF[0] + LAYER_SIZES[1]], trans_rhs=True)
    h = mxu_layer(h.astype(jnp.bfloat16), w2_ref[...],
                  ball[_B_OFF[1]:_B_OFF[1] + LAYER_SIZES[2]])
    h = mxu_layer(h.astype(jnp.bfloat16), w3_ref[...],
                  ball[_B_OFF[2]:_B_OFF[2] + LAYER_SIZES[3]])
    # h: (16, TB) f32 -- stays f32 for the VPU tail (no bf16 downcast after fc3).

    # fc4 / fc5 / fc6 (<=16 wide) on the VPU as unrolled broadcast MACs: the MXU
    # would spend nearly as many push/drain cycles as fc1/fc2 at <1% utilization.
    for li in range(3):
        din, dout = _TAIL_SIZES[li], _TAIL_SIZES[li + 1]
        w = wt[0:dout, _WT_OFF[li]:_WT_OFF[li] + din]              # (dout, din)
        b = ball[_B_OFF[3 + li]:_B_OFF[3 + li] + dout]             # (dout, 1)
        acc = jnp.broadcast_to(b, (dout, h.shape[1]))
        for k in range(din):                                       # static unroll
            acc = acc + w[:, k:k + 1] * h[k:k + 1, :]
        h = jnp.maximum(acc, 0.0) if li < 2 else acc               # fc6: raw logits

    o_ref[...] = h.astype(o_ref.dtype)


def _round_up(x, m):
    return ((x + m - 1) // m) * m


def _pack_operands(params):
    """bf16 MXU weights + one f32 tail-weight slab + one f32 bias slab."""
    mxu = [w.astype(jnp.bfloat16) for w, _ in params[:3]]
    wt = jnp.zeros((_WT_ROWS, _WT_COLS), jnp.float32)
    for li, (w, _) in enumerate(params[3:]):
        dout, din = w.shape
        wt = wt.at[:dout, _WT_OFF[li]:_WT_OFF[li] + din].set(w)
    pieces = []
    for _, b in params:
        pad = (-b.shape[0]) % 8
        pieces.append(jnp.pad(b.astype(jnp.float32), ((0, pad), (0, 0))))
    b_all = jnp.concatenate(pieces, axis=0)                        # (_B_ROWS, 1)
    return (*mxu, wt, b_all)


@functools.partial(jax.jit, static_argnames=("tb_max",))
def census_net_forward(x, params, tb_max=8192):
    """x: (B, 13) float32.  params: list of (W (out,in) f32, b (out,1) f32)."""
    B, F = x.shape
    assert F == NUM_FEATURES

    TB = min(tb_max, _round_up(B, 128))          # batch tile, multiple of 128 lanes
    assert TB % 128 == 0
    n_tiles = -(-B // TB)
    if n_tiles > 1 and n_tiles % 2:
        # Best-effort even tile count so both v7x TensorCores get work.
        n_tiles += 1
        TB = _round_up(-(-B // n_tiles), 128)
        n_tiles = -(-B // TB)
    B_pad = n_tiles * TB
    if B_pad != B:
        x = jnp.pad(x, ((0, B_pad - B), (0, 0)))  # only when B not a tile multiple

    w1b, w2b, w3b, wt, b_all = _pack_operands(params)

    in_specs = [
        pl.BlockSpec((TB, F), lambda i: (i, 0)),        # batch-tiled raw features
        # Constant index_maps -> weights/biases copied into VMEM once and kept
        # resident across all batch tiles.
        pl.BlockSpec(w1b.shape, lambda i: (0, 0)),
        pl.BlockSpec(w2b.shape, lambda i: (0, 0)),
        pl.BlockSpec(w3b.shape, lambda i: (0, 0)),
        pl.BlockSpec(wt.shape, lambda i: (0, 0)),
        pl.BlockSpec(b_all.shape, lambda i: (0, 0)),
    ]
    out_specs = pl.BlockSpec((LAYER_SIZES[-1], TB), lambda i: (0, i))

    flops = 2 * sum(a * b for a, b in zip(LAYER_SIZES[:-1], LAYER_SIZES[1:])) * B_pad
    bytes_acc = (x.size * 4 + w1b.size * 2 + w2b.size * 2 + w3b.size * 2
                 + wt.size * 4 + b_all.size * 4 + LAYER_SIZES[-1] * B_pad * 4)
    cost = pl.CostEstimate(flops=flops, transcendentals=0, bytes_accessed=bytes_acc)

    out = pl.pallas_call(
        census_mlp_kernel,
        out_shape=jax.ShapeDtypeStruct((LAYER_SIZES[-1], B_pad), jnp.float32),
        grid=(n_tiles,),
        in_specs=in_specs,
        out_specs=out_specs,
        compiler_params=pltpu.CompilerParams(
            dimension_semantics=("parallel",)),   # shards tiles on v7x dual TC
        cost_estimate=cost,
    )(x, w1b, w2b, w3b, wt, b_all)

    # (2, B) -> (B, 2) to match the PyTorch forward; a consumer that accepts
    # logits in (2, B) layout can take out[:, :B] directly and skip this pass.
    return jnp.transpose(out[:, :B])


def init_params(key):
    """torch.nn.Linear-style init: W (out, in), b (out, 1), U[-1/sqrt(fan_in), +]."""
    params = []
    for fan_in, fan_out in zip(LAYER_SIZES[:-1], LAYER_SIZES[1:]):
        key, kw, kb = jax.random.split(key, 3)
        bound = 1.0 / jnp.sqrt(float(fan_in))
        w = jax.random.uniform(kw, (fan_out, fan_in), jnp.float32, -bound, bound)
        b = jax.random.uniform(kb, (fan_out, 1), jnp.float32, -bound, bound)
        params.append((w, b))
    return params


def reference_forward(x, params):
    """Pure-JAX reference matching the kernel numerics:
    bf16 inputs/weights + f32 accumulation for fc1-fc3, exact f32 for fc4-fc6."""
    h = x.astype(jnp.bfloat16)
    for i, (w, b) in enumerate(params):
        if i < 3:
            h = jnp.dot(h, w.astype(jnp.bfloat16).T,
                        preferred_element_type=jnp.float32) + b.reshape(1, -1)
            h = jnp.maximum(h, 0.0)
            if i < 2:
                h = h.astype(jnp.bfloat16)
        else:
            h = jnp.dot(h, w.T, precision=lax.Precision.HIGHEST,
                        preferred_element_type=jnp.float32) + b.reshape(1, -1)
            if i < len(params) - 1:
                h = jnp.maximum(h, 0.0)
    return h


if __name__ == "__main__":
    key = jax.random.PRNGKey(0)
    key, kx = jax.random.split(key)

    batch = 8
    x = jax.random.normal(kx, (batch, NUM_FEATURES), dtype=jnp.float32)
    params = init_params(key)

    out = jax.block_until_ready(census_net_forward(x, params))
    ref = reference_forward(x, params)

    assert out.shape == (batch, 2), out.shape
    assert jnp.allclose(out, ref, atol=1e-3, rtol=1e-3), "mismatch vs reference"

    print("KERNEL_OK")
</pallas_src>

<mosaic_0001>
module attributes {stable_mosaic.version = 11 : i64} {
  func.func @census_mlp_kernel(%arg0: i32, %arg1: memref<128x13xf32, #tpu.memory_space<vmem>>, %arg2: memref<64x13xbf16, #tpu.memory_space<vmem>>, %arg3: memref<32x64xbf16, #tpu.memory_space<vmem>>, %arg4: memref<16x32xbf16, #tpu.memory_space<vmem>>, %arg5: memref<8x28xf32, #tpu.memory_space<vmem>>, %arg6: memref<136x1xf32, #tpu.memory_space<vmem>>, %arg7: memref<2x128xf32, #tpu.memory_space<vmem>>) attributes {dimension_semantics = [#tpu.dimension_semantics<parallel>], iteration_bounds = array<i64: 1>, scalar_prefetch = 0 : i64, scratch_operands = 0 : i64, tpu.core_type = #tpu.core_type<tc>, window_params = [{transform_indices = @transform_0, window_bounds = array<i64: 128, 13>}, {pipeline_mode = #tpu.pipeline_mode<synchronous>, transform_indices = @transform_1, window_bounds = array<i64: 64, 13>}, {pipeline_mode = #tpu.pipeline_mode<synchronous>, transform_indices = @transform_2, window_bounds = array<i64: 32, 64>}, {pipeline_mode = #tpu.pipeline_mode<synchronous>, transform_indices = @transform_3, window_bounds = array<i64: 16, 32>}, {pipeline_mode = #tpu.pipeline_mode<synchronous>, transform_indices = @transform_4, window_bounds = array<i64: 8, 28>}, {pipeline_mode = #tpu.pipeline_mode<synchronous>, transform_indices = @transform_5, window_bounds = array<i64: 136, 1>}, {transform_indices = @transform_6, window_bounds = array<i64: 2, 128>}]} {
    %c0 = arith.constant 0 : index
    %c0_0 = arith.constant 0 : index
    %0 = vector.load %arg1[%c0, %c0_0] : memref<128x13xf32, #tpu.memory_space<vmem>>, vector<128x13xf32>
    %1 = arith.truncf %0 : vector<128x13xf32> to vector<128x13xbf16>
    %c0_1 = arith.constant 0 : index
    %c0_2 = arith.constant 0 : index
    %2 = vector.load %arg6[%c0_1, %c0_2] : memref<136x1xf32, #tpu.memory_space<vmem>>, vector<136x1xf32>
    %c0_3 = arith.constant 0 : index
    %c0_4 = arith.constant 0 : index
    %3 = vector.load %arg5[%c0_3, %c0_4] : memref<8x28xf32, #tpu.memory_space<vmem>>, vector<8x28xf32>
    %c0_5 = arith.constant 0 : index
    %c0_6 = arith.constant 0 : index
    %4 = vector.load %arg2[%c0_5, %c0_6] : memref<64x13xbf16, #tpu.memory_space<vmem>>, vector<64x13xbf16>
    %5 = vector.extract_strided_slice %2 {offsets = [0, 0], sizes = [64, 1], strides = [1, 1]} : vector<136x1xf32> to vector<64x1xf32>
    %cst = arith.constant dense<0.000000e+00> : vector<64x128xf32>
    %6 = tpu.matmul %4, %1, %cst {dimension_numbers = #tpu.dot_dimension_numbers<[1], [1], [0], [0], [0, 0, 1, 0], [], []>} : vector<64x13xbf16>, vector<128x13xbf16>, vector<64x128xf32> -> vector<64x128xf32>
    %7 = vector.broadcast %5 : vector<64x1xf32> to vector<64x128xf32>
    %8 = arith.addf %6, %7 : vector<64x128xf32>
    %cst_7 = arith.constant 0.000000e+00 : f32
    %9 = vector.broadcast %cst_7 : f32 to vector<64x128xf32>
    %10 = arith.maximumf %8, %9 : vector<64x128xf32>
    %11 = arith.truncf %10 : vector<64x128xf32> to vector<64x128xbf16>
    %c0_8 = arith.constant 0 : index
    %c0_9 = arith.constant 0 : index
    %12 = vector.load %arg3[%c0_8, %c0_9] : memref<32x64xbf16, #tpu.memory_space<vmem>>, vector<32x64xbf16>
    %13 = vector.extract_strided_slice %2 {offsets = [64, 0], sizes = [32, 1], strides = [1, 1]} : vector<136x1xf32> to vector<32x1xf32>
    %cst_10 = arith.constant dense<0.000000e+00> : vector<32x128xf32>
    %14 = tpu.matmul %12, %11, %cst_10 {dimension_numbers = #tpu.dot_dimension_numbers<[1], [0], [0], [1], [0, 0, 1, 1], [], []>} : vector<32x64xbf16>, vector<64x128xbf16>, vector<32x128xf32> -> vector<32x128xf32>
    %15 = vector.broadcast %13 : vector<32x1xf32> to vector<32x128xf32>
    %16 = arith.addf %14, %15 : vector<32x128xf32>
    %cst_11 = arith.constant 0.000000e+00 : f32
    %17 = vector.broadcast %cst_11 : f32 to vector<32x128xf32>
    %18 = arith.maximumf %16, %17 : vector<32x128xf32>
    %19 = arith.truncf %18 : vector<32x128xf32> to vector<32x128xbf16>
    %c0_12 = arith.constant 0 : index
    %c0_13 = arith.constant 0 : index
    %20 = vector.load %arg4[%c0_12, %c0_13] : memref<16x32xbf16, #tpu.memory_space<vmem>>, vector<16x32xbf16>
    %21 = vector.extract_strided_slice %2 {offsets = [96, 0], sizes = [16, 1], strides = [1, 1]} : vector<136x1xf32> to vector<16x1xf32>
    %cst_14 = arith.constant dense<0.000000e+00> : vector<16x128xf32>
    %22 = tpu.matmul %20, %19, %cst_14 {dimension_numbers = #tpu.dot_dimension_numbers<[1], [0], [0], [1], [0, 0, 1, 1], [], []>} : vector<16x32xbf16>, vector<32x128xbf16>, vector<16x128xf32> -> vector<16x128xf32>
    %23 = vector.broadcast %21 : vector<16x1xf32> to vector<16x128xf32>
    %24 = arith.addf %22, %23 : vector<16x128xf32>
    %cst_15 = arith.constant 0.000000e+00 : f32
    %25 = vector.broadcast %cst_15 : f32 to vector<16x128xf32>
    %26 = arith.maximumf %24, %25 : vector<16x128xf32>
    %27 = vector.extract_strided_slice %3 {offsets = [0, 0], sizes = [8, 16], strides = [1, 1]} : vector<8x28xf32> to vector<8x16xf32>
    %28 = vector.extract_strided_slice %2 {offsets = [112, 0], sizes = [8, 1], strides = [1, 1]} : vector<136x1xf32> to vector<8x1xf32>
    %29 = vector.shape_cast %28 : vector<8x1xf32> to vector<8x1xf32>
    %30 = vector.broadcast %29 : vector<8x1xf32> to vector<8x128xf32>
    %31 = vector.extract_strided_slice %27 {offsets = [0, 0], sizes = [8, 1], strides = [1, 1]} : vector<8x16xf32> to vector<8x1xf32>
    %32 = vector.extract_strided_slice %26 {offsets = [0, 0], sizes = [1, 128], strides = [1, 1]} : vector<16x128xf32> to vector<1x128xf32>
    %33 = vector.broadcast %31 : vector<8x1xf32> to vector<8x128xf32>
    %34 = vector.broadcast %32 : vector<1x128xf32> to vector<8x128xf32>
    %35 = arith.mulf %33, %34 : vector<8x128xf32>
    %36 = arith.addf %30, %35 : vector<8x128xf32>
    %37 = vector.extract_strided_slice %27 {offsets = [0, 1], sizes = [8, 1], strides = [1, 1]} : vector<8x16xf32> to vector<8x1xf32>
    %38 = vector.extract_strided_slice %26 {offsets = [1, 0], sizes = [1, 128], strides = [1, 1]} : vector<16x128xf32> to vector<1x128xf32>
    %39 = vector.broadcast %37 : vector<8x1xf32> to vector<8x128xf32>
    %40 = vector.broadcast %38 : vector<1x128xf32> to vector<8x128xf32>
    %41 = arith.mulf %39, %40 : vector<8x128xf32>
    %42 = arith.addf %36, %41 : vector<8x128xf32>
    %43 = vector.extract_strided_slice %27 {offsets = [0, 2], sizes = [8, 1], strides = [1, 1]} : vector<8x16xf32> to vector<8x1xf32>
    %44 = vector.extract_strided_slice %26 {offsets = [2, 0], sizes = [1, 128], strides = [1, 1]} : vector<16x128xf32> to vector<1x128xf32>
    %45 = vector.broadcast %43 : vector<8x1xf32> to vector<8x128xf32>
    %46 = vector.broadcast %44 : vector<1x128xf32> to vector<8x128xf32>
    %47 = arith.mulf %45, %46 : vector<8x128xf32>
    %48 = arith.addf %42, %47 : vector<8x128xf32>
    %49 = vector.extract_strided_slice %27 {offsets = [0, 3], sizes = [8, 1], strides = [1, 1]} : vector<8x16xf32> to vector<8x1xf32>
    %50 = vector.extract_strided_slice %26 {offsets = [3, 0], sizes = [1, 128], strides = [1, 1]} : vector<16x128xf32> to vector<1x128xf32>
    %51 = vector.broadcast %49 : vector<8x1xf32> to vector<8x128xf32>
    %52 = vector.broadcast %50 : vector<1x128xf32> to vector<8x128xf32>
    %53 = arith.mulf %51, %52 : vector<8x128xf32>
    %54 = arith.addf %48, %53 : vector<8x128xf32>
    %55 = vector.extract_strided_slice %27 {offsets = [0, 4], sizes = [8, 1], strides = [1, 1]} : vector<8x16xf32> to vector<8x1xf32>
    %56 = vector.extract_strided_slice %26 {offsets = [4, 0], sizes = [1, 128], strides = [1, 1]} : vector<16x128xf32> to vector<1x128xf32>
    %57 = vector.broadcast %55 : vector<8x1xf32> to vector<8x128xf32>
    %58 = vector.broadcast %56 : vector<1x128xf32> to vector<8x128xf32>
    %59 = arith.mulf %57, %58 : vector<8x128xf32>
    %60 = arith.addf %54, %59 : vector<8x128xf32>
    %61 = vector.extract_strided_slice %27 {offsets = [0, 5], sizes = [8, 1], strides = [1, 1]} : vector<8x16xf32> to vector<8x1xf32>
    %62 = vector.extract_strided_slice %26 {offsets = [5, 0], sizes = [1, 128], strides = [1, 1]} : vector<16x128xf32> to vector<1x128xf32>
    %63 = vector.broadcast %61 : vector<8x1xf32> to vector<8x128xf32>
    %64 = vector.broadcast %62 : vector<1x128xf32> to vector<8x128xf32>
    %65 = arith.mulf %63, %64 : vector<8x128xf32>
    %66 = arith.addf %60, %65 : vector<8x128xf32>
    %67 = vector.extract_strided_slice %27 {offsets = [0, 6], sizes = [8, 1], strides = [1, 1]} : vector<8x16xf32> to vector<8x1xf32>
    %68 = vector.extract_strided_slice %26 {offsets = [6, 0], sizes = [1, 128], strides = [1, 1]} : vector<16x128xf32> to vector<1x128xf32>
    %69 = vector.broadcast %67 : vector<8x1xf32> to vector<8x128xf32>
    %70 = vector.broadcast %68 : vector<1x128xf32> to vector<8x128xf32>
    %71 = arith.mulf %69, %70 : vector<8x128xf32>
    %72 = arith.addf %66, %71 : vector<8x128xf32>
    %73 = vector.extract_strided_slice %27 {offsets = [0, 7], sizes = [8, 1], strides = [1, 1]} : vector<8x16xf32> to vector<8x1xf32>
    %74 = vector.extract_strided_slice %26 {offsets = [7, 0], sizes = [1, 128], strides = [1, 1]} : vector<16x128xf32> to vector<1x128xf32>
    %75 = vector.broadcast %73 : vector<8x1xf32> to vector<8x128xf32>
    %76 = vector.broadcast %74 : vector<1x128xf32> to vector<8x128xf32>
    %77 = arith.mulf %75, %76 : vector<8x128xf32>
    %78 = arith.addf %72, %77 : vector<8x128xf32>
    %79 = vector.extract_strided_slice %27 {offsets = [0, 8], sizes = [8, 1], strides = [1, 1]} : vector<8x16xf32> to vector<8x1xf32>
    %80 = vector.extract_strided_slice %26 {offsets = [8, 0], sizes = [1, 128], strides = [1, 1]} : vector<16x128xf32> to vector<1x128xf32>
    %81 = vector.broadcast %79 : vector<8x1xf32> to vector<8x128xf32>
    %82 = vector.broadcast %80 : vector<1x128xf32> to vector<8x128xf32>
    %83 = arith.mulf %81, %82 : vector<8x128xf32>
    %84 = arith.addf %78, %83 : vector<8x128xf32>
    %85 = vector.extract_strided_slice %27 {offsets = [0, 9], sizes = [8, 1], strides = [1, 1]} : vector<8x16xf32> to vector<8x1xf32>
    %86 = vector.extract_strided_slice %26 {offsets = [9, 0], sizes = [1, 128], strides = [1, 1]} : vector<16x128xf32> to vector<1x128xf32>
    %87 = vector.broadcast %85 : vector<8x1xf32> to vector<8x128xf32>
    %88 = vector.broadcast %86 : vector<1x128xf32> to vector<8x128xf32>
    %89 = arith.mulf %87, %88 : vector<8x128xf32>
    %90 = arith.addf %84, %89 : vector<8x128xf32>
    %91 = vector.extract_strided_slice %27 {offsets = [0, 10], sizes = [8, 1], strides = [1, 1]} : vector<8x16xf32> to vector<8x1xf32>
    %92 = vector.extract_strided_slice %26 {offsets = [10, 0], sizes = [1, 128], strides = [1, 1]} : vector<16x128xf32> to vector<1x128xf32>
    %93 = vector.broadcast %91 : vector<8x1xf32> to vector<8x128xf32>
    %94 = vector.broadcast %92 : vector<1x128xf32> to vector<8x128xf32>
    %95 = arith.mulf %93, %94 : vector<8x128xf32>
    %96 = arith.addf %90, %95 : vector<8x128xf32>
    %97 = vector.extract_strided_slice %27 {offsets = [0, 11], sizes = [8, 1], strides = [1, 1]} : vector<8x16xf32> to vector<8x1xf32>
    %98 = vector.extract_strided_slice %26 {offsets = [11, 0], sizes = [1, 128], strides = [1, 1]} : vector<16x128xf32> to vector<1x128xf32>
    %99 = vector.broadcast %97 : vector<8x1xf32> to vector<8x128xf32>
    %100 = vector.broadcast %98 : vector<1x128xf32> to vector<8x128xf32>
    %101 = arith.mulf %99, %100 : vector<8x128xf32>
    %102 = arith.addf %96, %101 : vector<8x128xf32>
    %103 = vector.extract_strided_slice %27 {offsets = [0, 12], sizes = [8, 1], strides = [1, 1]} : vector<8x16xf32> to vector<8x1xf32>
    %104 = vector.extract_strided_slice %26 {offsets = [12, 0], sizes = [1, 128], strides = [1, 1]} : vector<16x128xf32> to vector<1x128xf32>
    %105 = vector.broadcast %103 : vector<8x1xf32> to vector<8x128xf32>
    %106 = vector.broadcast %104 : vector<1x128xf32> to vector<8x128xf32>
    %107 = arith.mulf %105, %106 : vector<8x128xf32>
    %108 = arith.addf %102, %107 : vector<8x128xf32>
    %109 = vector.extract_strided_slice %27 {offsets = [0, 13], sizes = [8, 1], strides = [1, 1]} : vector<8x16xf32> to vector<8x1xf32>
    %110 = vector.extract_strided_slice %26 {offsets = [13, 0], sizes = [1, 128], strides = [1, 1]} : vector<16x128xf32> to vector<1x128xf32>
    %111 = vector.broadcast %109 : vector<8x1xf32> to vector<8x128xf32>
    %112 = vector.broadcast %110 : vector<1x128xf32> to vector<8x128xf32>
    %113 = arith.mulf %111, %112 : vector<8x128xf32>
    %114 = arith.addf %108, %113 : vector<8x128xf32>
    %115 = vector.extract_strided_slice %27 {offsets = [0, 14], sizes = [8, 1], strides = [1, 1]} : vector<8x16xf32> to vector<8x1xf32>
    %116 = vector.extract_strided_slice %26 {offsets = [14, 0], sizes = [1, 128], strides = [1, 1]} : vector<16x128xf32> to vector<1x128xf32>
    %117 = vector.broadcast %115 : vector<8x1xf32> to vector<8x128xf32>
    %118 = vector.broadcast %116 : vector<1x128xf32> to vector<8x128xf32>
    %119 = arith.mulf %117, %118 : vector<8x128xf32>
    %120 = arith.addf %114, %119 : vector<8x128xf32>
    %121 = vector.extract_strided_slice %27 {offsets = [0, 15], sizes = [8, 1], strides = [1, 1]} : vector<8x16xf32> to vector<8x1xf32>
    %122 = vector.extract_strided_slice %26 {offsets = [15, 0], sizes = [1, 128], strides = [1, 1]} : vector<16x128xf32> to vector<1x128xf32>
    %123 = vector.broadcast %121 : vector<8x1xf32> to vector<8x128xf32>
    %124 = vector.broadcast %122 : vector<1x128xf32> to vector<8x128xf32>
    %125 = arith.mulf %123, %124 : vector<8x128xf32>
    %126 = arith.addf %120, %125 : vector<8x128xf32>
    %cst_16 = arith.constant 0.000000e+00 : f32
    %127 = vector.broadcast %cst_16 : f32 to vector<8x128xf32>
    %128 = arith.maximumf %126, %127 : vector<8x128xf32>
    %129 = vector.extract_strided_slice %3 {offsets = [0, 16], sizes = [4, 8], strides = [1, 1]} : vector<8x28xf32> to vector<4x8xf32>
    %130 = vector.extract_strided_slice %2 {offsets = [120, 0], sizes = [4, 1], strides = [1, 1]} : vector<136x1xf32> to vector<4x1xf32>
    %131 = vector.shape_cast %130 : vector<4x1xf32> to vector<4x1xf32>
    %132 = vector.broadcast %131 : vector<4x1xf32> to vector<4x128xf32>
    %133 = vector.extract_strided_slice %129 {offsets = [0, 0], sizes = [4, 1], strides = [1, 1]} : vector<4x8xf32> to vector<4x1xf32>
    %134 = vector.extract_strided_slice %128 {offsets = [0, 0], sizes = [1, 128], strides = [1, 1]} : vector<8x128xf32> to vector<1x128xf32>
    %135 = vector.broadcast %133 : vector<4x1xf32> to vector<4x128xf32>
    %136 = vector.broadcast %134 : vector<1x128xf32> to vector<4x128xf32>
    %137 = arith.mulf %135, %136 : vector<4x128xf32>
    %138 = arith.addf %132, %137 : vector<4x128xf32>
    %139 = vector.extract_strided_slice %129 {offsets = [0, 1], sizes = [4, 1], strides = [1, 1]} : vector<4x8xf32> to vector<4x1xf32>
    %140 = vector.extract_strided_slice %128 {offsets = [1, 0], sizes = [1, 128], strides = [1, 1]} : vector<8x128xf32> to vector<1x128xf32>
    %141 = vector.broadcast %139 : vector<4x1xf32> to vector<4x128xf32>
    %142 = vector.broadcast %140 : vector<1x128xf32> to vector<4x128xf32>
    %143 = arith.mulf %141, %142 : vector<4x128xf32>
    %144 = arith.addf %138, %143 : vector<4x128xf32>
    %145 = vector.extract_strided_slice %129 {offsets = [0, 2], sizes = [4, 1], strides = [1, 1]} : vector<4x8xf32> to vector<4x1xf32>
    %146 = vector.extract_strided_slice %128 {offsets = [2, 0], sizes = [1, 128], strides = [1, 1]} : vector<8x128xf32> to vector<1x128xf32>
    %147 = vector.broadcast %145 : vector<4x1xf32> to vector<4x128xf32>
    %148 = vector.broadcast %146 : vector<1x128xf32> to vector<4x128xf32>
    %149 = arith.mulf %147, %148 : vector<4x128xf32>
    %150 = arith.addf %144, %149 : vector<4x128xf32>
    %151 = vector.extract_strided_slice %129 {offsets = [0, 3], sizes = [4, 1], strides = [1, 1]} : vector<4x8xf32> to vector<4x1xf32>
    %152 = vector.extract_strided_slice %128 {offsets = [3, 0], sizes = [1, 128], strides = [1, 1]} : vector<8x128xf32> to vector<1x128xf32>
    %153 = vector.broadcast %151 : vector<4x1xf32> to vector<4x128xf32>
    %154 = vector.broadcast %152 : vector<1x128xf32> to vector<4x128xf32>
    %155 = arith.mulf %153, %154 : vector<4x128xf32>
    %156 = arith.addf %150, %155 : vector<4x128xf32>
    %157 = vector.extract_strided_slice %129 {offsets = [0, 4], sizes = [4, 1], strides = [1, 1]} : vector<4x8xf32> to vector<4x1xf32>
    %158 = vector.extract_strided_slice %128 {offsets = [4, 0], sizes = [1, 128], strides = [1, 1]} : vector<8x128xf32> to vector<1x128xf32>
    %159 = vector.broadcast %157 : vector<4x1xf32> to vector<4x128xf32>
    %160 = vector.broadcast %158 : vector<1x128xf32> to vector<4x128xf32>
    %161 = arith.mulf %159, %160 : vector<4x128xf32>
    %162 = arith.addf %156, %161 : vector<4x128xf32>
    %163 = vector.extract_strided_slice %129 {offsets = [0, 5], sizes = [4, 1], strides = [1, 1]} : vector<4x8xf32> to vector<4x1xf32>
    %164 = vector.extract_strided_slice %128 {offsets = [5, 0], sizes = [1, 128], strides = [1, 1]} : vector<8x128xf32> to vector<1x128xf32>
    %165 = vector.broadcast %163 : vector<4x1xf32> to vector<4x128xf32>
    %166 = vector.broadcast %164 : vector<1x128xf32> to vector<4x128xf32>
    %167 = arith.mulf %165, %166 : vector<4x128xf32>
    %168 = arith.addf %162, %167 : vector<4x128xf32>
    %169 = vector.extract_strided_slice %129 {offsets = [0, 6], sizes = [4, 1], strides = [1, 1]} : vector<4x8xf32> to vector<4x1xf32>
    %170 = vector.extract_strided_slice %128 {offsets = [6, 0], sizes = [1, 128], strides = [1, 1]} : vector<8x128xf32> to vector<1x128xf32>
    %171 = vector.broadcast %169 : vector<4x1xf32> to vector<4x128xf32>
    %172 = vector.broadcast %170 : vector<1x128xf32> to vector<4x128xf32>
    %173 = arith.mulf %171, %172 : vector<4x128xf32>
    %174 = arith.addf %168, %173 : vector<4x128xf32>
    %175 = vector.extract_strided_slice %129 {offsets = [0, 7], sizes = [4, 1], strides = [1, 1]} : vector<4x8xf32> to vector<4x1xf32>
    %176 = vector.extract_strided_slice %128 {offsets = [7, 0], sizes = [1, 128], strides = [1, 1]} : vector<8x128xf32> to vector<1x128xf32>
    %177 = vector.broadcast %175 : vector<4x1xf32> to vector<4x128xf32>
    %178 = vector.broadcast %176 : vector<1x128xf32> to vector<4x128xf32>
    %179 = arith.mulf %177, %178 : vector<4x128xf32>
    %180 = arith.addf %174, %179 : vector<4x128xf32>
    %cst_17 = arith.constant 0.000000e+00 : f32
    %181 = vector.broadcast %cst_17 : f32 to vector<4x128xf32>
    %182 = arith.maximumf %180, %181 : vector<4x128xf32>
    %183 = vector.extract_strided_slice %3 {offsets = [0, 24], sizes = [2, 4], strides = [1, 1]} : vector<8x28xf32> to vector<2x4xf32>
    %184 = vector.extract_strided_slice %2 {offsets = [128, 0], sizes = [2, 1], strides = [1, 1]} : vector<136x1xf32> to vector<2x1xf32>
    %185 = vector.shape_cast %184 : vector<2x1xf32> to vector<2x1xf32>
    %186 = vector.broadcast %185 : vector<2x1xf32> to vector<2x128xf32>
    %187 = vector.extract_strided_slice %183 {offsets = [0, 0], sizes = [2, 1], strides = [1, 1]} : vector<2x4xf32> to vector<2x1xf32>
    %188 = vector.extract_strided_slice %182 {offsets = [0, 0], sizes = [1, 128], strides = [1, 1]} : vector<4x128xf32> to vector<1x128xf32>
    %189 = vector.broadcast %187 : vector<2x1xf32> to vector<2x128xf32>
    %190 = vector.broadcast %188 : vector<1x128xf32> to vector<2x128xf32>
    %191 = arith.mulf %189, %190 : vector<2x128xf32>
    %192 = arith.addf %186, %191 : vector<2x128xf32>
    %193 = vector.extract_strided_slice %183 {offsets = [0, 1], sizes = [2, 1], strides = [1, 1]} : vector<2x4xf32> to vector<2x1xf32>
    %194 = vector.extract_strided_slice %182 {offsets = [1, 0], sizes = [1, 128], strides = [1, 1]} : vector<4x128xf32> to vector<1x128xf32>
    %195 = vector.broadcast %193 : vector<2x1xf32> to vector<2x128xf32>
    %196 = vector.broadcast %194 : vector<1x128xf32> to vector<2x128xf32>
    %197 = arith.mulf %195, %196 : vector<2x128xf32>
    %198 = arith.addf %192, %197 : vector<2x128xf32>
    %199 = vector.extract_strided_slice %183 {offsets = [0, 2], sizes = [2, 1], strides = [1, 1]} : vector<2x4xf32> to vector<2x1xf32>
    %200 = vector.extract_strided_slice %182 {offsets = [2, 0], sizes = [1, 128], strides = [1, 1]} : vector<4x128xf32> to vector<1x128xf32>
    %201 = vector.broadcast %199 : vector<2x1xf32> to vector<2x128xf32>
    %202 = vector.broadcast %200 : vector<1x128xf32> to vector<2x128xf32>
    %203 = arith.mulf %201, %202 : vector<2x128xf32>
    %204 = arith.addf %198, %203 : vector<2x128xf32>
    %205 = vector.extract_strided_slice %183 {offsets = [0, 3], sizes = [2, 1], strides = [1, 1]} : vector<2x4xf32> to vector<2x1xf32>
    %206 = vector.extract_strided_slice %182 {offsets = [3, 0], sizes = [1, 128], strides = [1, 1]} : vector<4x128xf32> to vector<1x128xf32>
    %207 = vector.broadcast %205 : vector<2x1xf32> to vector<2x128xf32>
    %208 = vector.broadcast %206 : vector<1x128xf32> to vector<2x128xf32>
    %209 = arith.mulf %207, %208 : vector<2x128xf32>
    %210 = arith.addf %204, %209 : vector<2x128xf32>
    %c0_18 = arith.constant 0 : index
    %c0_19 = arith.constant 0 : index
    %211 = vector.load %arg7[%c0_18, %c0_19] : memref<2x128xf32, #tpu.memory_space<vmem>>, vector<2x128xf32>
    tpu.vector_store %arg7[%c0_18, %c0_19], %210 {strides = array<i32>} : memref<2x128xf32, #tpu.memory_space<vmem>>, vector<2x128xf32>,
    return
  }
  func.func @transform_0(%arg0: i32) -> (i32, i32) {
    %c0_i32 = arith.constant 0 : i32
    %c0_i32_0 = arith.constant 0 : i32
    return %arg0, %c0_i32 : i32, i32
  }
  func.func @transform_1(%arg0: i32) -> (i32, i32) {
    %c0_i32 = arith.constant 0 : i32
    %c0_i32_0 = arith.constant 0 : i32
    %c0_i32_1 = arith.constant 0 : i32
    return %c0_i32, %c0_i32_0 : i32, i32
  }
  func.func @transform_2(%arg0: i32) -> (i32, i32) {
    %c0_i32 = arith.constant 0 : i32
    %c0_i32_0 = arith.constant 0 : i32
    %c0_i32_1 = arith.constant 0 : i32
    return %c0_i32, %c0_i32_0 : i32, i32
  }
  func.func @transform_3(%arg0: i32) -> (i32, i32) {
    %c0_i32 = arith.constant 0 : i32
    %c0_i32_0 = arith.constant 0 : i32
    %c0_i32_1 = arith.constant 0 : i32
    return %c0_i32, %c0_i32_0 : i32, i32
  }
  func.func @transform_4(%arg0: i32) -> (i32, i32) {
    %c0_i32 = arith.constant 0 : i32
    %c0_i32_0 = arith.constant 0 : i32
    %c0_i32_1 = arith.constant 0 : i32
    return %c0_i32, %c0_i32_0 : i32, i32
  }
  func.func @transform_5(%arg0: i32) -> (i32, i32) {
    %c0_i32 = arith.constant 0 : i32
    %c0_i32_0 = arith.constant 0 : i32
    %c0_i32_1 = arith.constant 0 : i32
    return %c0_i32, %c0_i32_0 : i32, i32
  }
  func.func @transform_6(%arg0: i32) -> (i32, i32) {
    %c0_i32 = arith.constant 0 : i32
    %c0_i32_0 = arith.constant 0 : i32
    return %c0_i32, %arg0 : i32, i32
  }
}

</mosaic_0001>

<llo_original>
// kernel: census_net_forward.1
$region0: #{census_net_forward.1}
  #allocation0 [shape = 'u32[]', space=smem, size = 0x4, offset = 0x4, fixed_abs, tag = 'smem constant byte address 0x4 - core index']
  #allocation1 [shape = 'u32[144,128]{1,0:T(1,128)}', space=vmem, size = 0x12000, scoped, tag = 'internal scratch']
  %s0 = inlined_call_operand.vmem [shape: f32[128,13], index: 0, kind: input, shape index: {}]
  %s1 = inlined_call_operand.vmem [shape: bf16[64,13], index: 1, kind: input, shape index: {}]
  %s2 = inlined_call_operand.vmem [shape: bf16[32,64], index: 2, kind: input, shape index: {}]
  %s3 = inlined_call_operand.vmem [shape: bf16[16,32], index: 3, kind: input, shape index: {}]
  %s4 = inlined_call_operand.vmem [shape: f32[8,28], index: 4, kind: input, shape index: {}]
  %s5 = inlined_call_operand.vmem [shape: f32[136,1], index: 5, kind: input, shape index: {}]
  %s6 = inlined_call_operand.vmem [shape: f32[2,128], index: 6, kind: output, shape index: {}]
  %s7 = sld [smem:[#allocation0]]
  $region34: #{census_net_forward.1} parent=0
    _
  %s9 = ssub.s32 1, %s7
  %s10 = scalar_select 0, %s9, %s7
  // Predicated region
  $region2: #{census_net_forward.1} parent=0 // pred_check
    _
  $region3: #{census_net_forward.1} parent=0 // pred_check_branch
    %12 = sbr.rel (0) target = $region5
  $region4: #{census_net_forward.1} parent=0 // pred_region
    _
  $region5: #{census_net_forward.1} parent=0 // pred_fallthru
    _
  // Predicated region
  $region6: #{census_net_forward.1} parent=0 // pred_check
    _
  $region7: #{census_net_forward.1} parent=0 // pred_check_branch
    %14 = sbr.rel (0) target = $region9
  $region8: #{census_net_forward.1} parent=0 // pred_region
    _
  $region9: #{census_net_forward.1} parent=0 // pred_fallthru
    _
  // Predicated region
  $region10: #{census_net_forward.1} parent=0 // pred_check
    _
  $region11: #{census_net_forward.1} parent=0 // pred_check_branch
    %16 = sbr.rel (0) target = $region13
  $region12: #{census_net_forward.1} parent=0 // pred_region
    _
  $region13: #{census_net_forward.1} parent=0 // pred_fallthru
    _
  // Predicated region
  $region14: #{census_net_forward.1} parent=0 // pred_check
    _
  $region15: #{census_net_forward.1} parent=0 // pred_check_branch
    %18 = sbr.rel (0) target = $region17
  $region16: #{census_net_forward.1} parent=0 // pred_region
    _
  $region17: #{census_net_forward.1} parent=0 // pred_fallthru
    _
  // Predicated region
  $region18: #{census_net_forward.1} parent=0 // pred_check
    _
  $region19: #{census_net_forward.1} parent=0 // pred_check_branch
    %20 = sbr.rel (0) target = $region21
  $region20: #{census_net_forward.1} parent=0 // pred_region
    _
  $region21: #{census_net_forward.1} parent=0 // pred_fallthru
    _
  // Predicated region
  $region22: #{census_net_forward.1} parent=0 // pred_check
    _
  $region23: #{census_net_forward.1} parent=0 // pred_check_branch
    %22 = sbr.rel (0) target = $region25
  $region24: #{census_net_forward.1} parent=0 // pred_region
    _
  $region25: #{census_net_forward.1} parent=0 // pred_fallthru
    _
  %v24 = vld [vmem:[%s0] sm:$0xff]
  %v25 = vld [vmem:[%s0 + $0x8] sm:$0xff]
  %v26 = vld [vmem:[%s0 + $0x10] sm:$0xff]
  %v27 = vld [vmem:[%s0 + $0x18] sm:$0xff]
  %v28 = vld [vmem:[%s0 + $0x20] sm:$0xff]
  %v29 = vld [vmem:[%s0 + $0x28] sm:$0xff]
  %v30 = vld [vmem:[%s0 + $0x30] sm:$0xff]
  %v31 = vld [vmem:[%s0 + $0x38] sm:$0xff]
  %v32 = vld [vmem:[%s0 + $0x40] sm:$0xff]
  %v33 = vld [vmem:[%s0 + $0x48] sm:$0xff]
  %v34 = vld [vmem:[%s0 + $0x50] sm:$0xff]
  %v35 = vld [vmem:[%s0 + $0x58] sm:$0xff]
  %v36 = vld [vmem:[%s0 + $0x60] sm:$0xff]
  %v37 = vld [vmem:[%s0 + $0x68] sm:$0xff]
  %v38 = vld [vmem:[%s0 + $0x70] sm:$0xff]
  %v39 = vld [vmem:[%s0 + $0x78] sm:$0xff]
  %v40 = vpack.c.bf16 %v25, %v24
  %v41 = vpack.c.bf16 %v27, %v26
  %v42 = vpack.c.bf16 %v29, %v28
  %v43 = vpack.c.bf16 %v31, %v30
  %v44 = vpack.c.bf16 %v33, %v32
  %v45 = vpack.c.bf16 %v35, %v34
  %v46 = vpack.c.bf16 %v37, %v36
  %v47 = vpack.c.bf16 %v39, %v38
  %v48 = vld [vmem:[%s5] sm:$0xff]
  %v49 = vld [vmem:[%s5 + $0x8] sm:$0xff]
  %v50 = vld [vmem:[%s5 + $0x10] sm:$0xff]
  %v51 = vld [vmem:[%s5 + $0x18] sm:$0xff]
  %v52 = vld [vmem:[%s5 + $0x20] sm:$0xff]
  %v53 = vld [vmem:[%s5 + $0x28] sm:$0xff]
  %v54 = vld [vmem:[%s5 + $0x30] sm:$0xff]
  %v55 = vld [vmem:[%s5 + $0x38] sm:$0xff]
  %v56 = vld [vmem:[%s5 + $0x40] sm:$0xff]
  %v57 = vld [vmem:[%s5 + $0x48] sm:$0xff]
  %v58 = vld [vmem:[%s5 + $0x50] sm:$0xff]
  %v59 = vld [vmem:[%s5 + $0x58] sm:$0xff]
  %v60 = vld [vmem:[%s5 + $0x60] sm:$0xff]
  %v61 = vld [vmem:[%s5 + $0x68] sm:$0xff]
  %v62 = vld [vmem:[%s5 + $0x70] sm:$0xff]
  %v63 = vld [vmem:[%s5 + $0x78] sm:$0xff]
  %v64 = vld [vmem:[%s5 + $0x80] sm:$0xff]
  %v65 = vld [vmem:[%s4] sm:$0xff]
  %v66 = vld [vmem:[%s1] sm:$0xf]
  %v67 = vld [vmem:[%s1 + $0x4] sm:$0xf]
  %v68 = vld [vmem:[%s1 + $0x8] sm:$0xf]
  %v69 = vld [vmem:[%s1 + $0xc] sm:$0xf]
  %v70 = vld [vmem:[%s1 + $0x10] sm:$0xf]
  %v71 = vld [vmem:[%s1 + $0x14] sm:$0xf]
  %v72 = vld [vmem:[%s1 + $0x18] sm:$0xf]
  %v73 = vld [vmem:[%s1 + $0x1c] sm:$0xf]
  %75 = vset.pattern.permute.xlu0 0
  %76 = vperm.xlu0 %75, %v48
  %v77 = vpop.permute.xlu0 %76
  %80 = vset.pattern.permute.xlu0 0
  %81 = vperm.xlu0 %80, %v49
  %v82 = vpop.permute.xlu0 %81
  %85 = vset.pattern.permute.xlu0 0
  %86 = vperm.xlu0 %85, %v50
  %v87 = vpop.permute.xlu0 %86
  %90 = vset.pattern.permute.xlu0 0
  %91 = vperm.xlu0 %90, %v51
  %v92 = vpop.permute.xlu0 %91
  %95 = vset.pattern.permute.xlu0 0
  %96 = vperm.xlu0 %95, %v52
  %v97 = vpop.permute.xlu0 %96
  %100 = vset.pattern.permute.xlu0 0
  %101 = vperm.xlu0 %100, %v53
  %v102 = vpop.permute.xlu0 %101
  %105 = vset.pattern.permute.xlu0 0
  %106 = vperm.xlu0 %105, %v54
  %v107 = vpop.permute.xlu0 %106
  %110 = vset.pattern.permute.xlu0 0
  %111 = vperm.xlu0 %110, %v55
  %v112 = vpop.permute.xlu0 %111
  %v122 = vunpack.c.l.b16 %v66
  %v123 = vunpack.c.l.b16 %v67
  %v124 = vunpack.c.l.b16 %v68
  %v125 = vunpack.c.l.b16 %v69
  %v126 = vunpack.c.l.b16 %v70
  %v127 = vunpack.c.l.b16 %v71
  %v128 = vunpack.c.l.b16 %v72
  %v129 = vunpack.c.l.b16 %v73
  %v130 = vpack.c.b16 %v123, %v122
  %v131 = vpack.c.b16 %v125, %v124
  %v132 = vpack.c.b16 %v127, %v126
  %v133 = vpack.c.b16 %v129, %v128
  %vm134 = vcmask 105472
  %v136 = vsel %vm134, %v130, 0
  %v139 = vsel %vm134, %v131, 0
  %v142 = vsel %vm134, %v132, 0
  %v145 = vsel %vm134, %v133, 0
  %v148 = vsel %vm134, %v40, 0
  %v151 = vsel %vm134, %v41, 0
  %v154 = vsel %vm134, %v42, 0
  %v157 = vsel %vm134, %v43, 0
  %v160 = vsel %vm134, %v44, 0
  %v163 = vsel %vm134, %v45, 0
  %v166 = vsel %vm134, %v46, 0
  %v169 = vsel %vm134, %v47, 0
  %171 = vmatprep.subr.bf16.mxu0 0
  %172 = vmatpush1.bf16.xpose.msra.mxu0 %v169
  %173 = vmatprep.subr.bf16.mxu0 0
  %174 = vmatpush1.bf16.xpose.msra.mxu0 %v166
  %175 = vmatprep.subr.bf16.mxu0 0
  %176 = vmatpush1.bf16.xpose.msra.mxu0 %v163
  %177 = vmatprep.subr.bf16.mxu0 0
  %178 = vmatpush1.bf16.xpose.msra.mxu0 %v160
  %179 = vmatprep.subr.bf16.mxu0 0
  %180 = vmatpush1.bf16.xpose.msra.mxu0 %v157
  %181 = vmatprep.subr.bf16.mxu0 0
  %182 = vmatpush1.bf16.xpose.msra.mxu0 %v154
  %183 = vmatprep.subr.bf16.mxu0 0
  %184 = vmatpush1.bf16.xpose.msra.mxu0 %v151
  %185 = vmatprep.subr.bf16.mxu0 0
  %186 = vmatpush1.bf16.xpose.msra.mxu0 %v148
  %187 = vmatprep.subr.bf16.mxu0 0
  %188 = vmatpush2.bf16.xpose.msra.mxu0 0
  %189 = vmatprep.subr.bf16.mxu0 0
  %190 = vmatpush2.bf16.xpose.msra.mxu0 0
  %191 = vmatprep.subr.bf16.mxu0 0
  %192 = vmatpush2.bf16.xpose.msra.mxu0 0
  %193 = vmatprep.subr.bf16.mxu0 0
  %194 = vmatpush2.bf16.xpose.msra.mxu0 0
  %195 = vmatprep.subr.bf16.mxu0 0
  %196 = vmatpush2.bf16.xpose.msra.mxu0 0
  %197 = vmatprep.subr.bf16.mxu0 0
  %198 = vmatpush2.bf16.xpose.msra.mxu0 0
  %199 = vmatprep.subr.bf16.mxu0 0
  %200 = vmatpush2.bf16.xpose.msra.mxu0 0
  %201 = vmatprep.subr.bf16.mxu0 0
  %202 = vmatpush2.bf16.xpose.msra.mxu0 0
  %203 = vmatprep.mubr.bf16.mxu0 0
  %204 = vmatmul.mubr.bf16.gmra.mxu0 %v136
  %v205 = vpop.f32.mrf.mxu0
  %v206 = vadd.f32 %v77, %v205
  %v207 = vpop.f32.mrf.mxu0
  %v208 = vpop.f32.mrf.mxu0
  %v209 = vadd.f32 %v82, %v208
  %v210 = vpop.f32.mrf.mxu0
  %211 = vmatprep.mubr.bf16.mxu0 0
  %212 = vmatmul.mubr.bf16.gmra.mxu0 %v139
  %v213 = vpop.f32.mrf.mxu0
  %v214 = vadd.f32 %v87, %v213
  %v215 = vpop.f32.mrf.mxu0
  %v216 = vpop.f32.mrf.mxu0
  %v217 = vadd.f32 %v92, %v216
  %v218 = vpop.f32.mrf.mxu0
  %219 = vmatprep.mubr.bf16.mxu0 0
  %220 = vmatmul.mubr.bf16.gmra.mxu0 %v142
  %v221 = vpop.f32.mrf.mxu0
  %v222 = vadd.f32 %v97, %v221
  %v223 = vpop.f32.mrf.mxu0
  %v224 = vpop.f32.mrf.mxu0
  %v225 = vadd.f32 %v102, %v224
  %v226 = vpop.f32.mrf.mxu0
  %227 = vmatprep.mubr.bf16.mxu0 0
  %228 = vmatmul.mubr.bf16.gmra.mxu0 %v145
  %v229 = vpop.f32.mrf.mxu0
  %v230 = vadd.f32 %v107, %v229
  %v231 = vpop.f32.mrf.mxu0
  %v232 = vpop.f32.mrf.mxu0
  %v233 = vadd.f32 %v112, %v232
  %v234 = vpop.f32.mrf.mxu0
  %235 = vdwg.mxu0
  %v236 = vmax.f32 %v206, 0.0
  %v237 = vmax.f32 %v209, 0.0
  %v238 = vmax.f32 %v214, 0.0
  %v239 = vmax.f32 %v217, 0.0
  %v240 = vmax.f32 %v222, 0.0
  %v241 = vmax.f32 %v225, 0.0
  %v242 = vmax.f32 %v230, 0.0
  %v243 = vmax.f32 %v233, 0.0
  %v244 = vpack.c.bf16 %v237, %v236
  %v245 = vpack.c.bf16 %v239, %v238
  %v246 = vpack.c.bf16 %v241, %v240
  %v247 = vpack.c.bf16 %v243, %v242
  %v248 = vld [vmem:[%s2] sm:$0xf]
  %v249 = vld [vmem:[%s2 + $0x4] sm:$0xf]
  %v250 = vld [vmem:[%s2 + $0x8] sm:$0xf]
  %v251 = vld [vmem:[%s2 + $0xc] sm:$0xf]
  %253 = vset.pattern.permute.xlu0 0
  %254 = vperm.xlu0 %253, %v56
  %v255 = vpop.permute.xlu0 %254
  %258 = vset.pattern.permute.xlu0 0
  %259 = vperm.xlu0 %258, %v57
  %v260 = vpop.permute.xlu0 %259
  %263 = vset.pattern.permute.xlu0 0
  %264 = vperm.xlu0 %263, %v58
  %v265 = vpop.permute.xlu0 %264
  %268 = vset.pattern.permute.xlu0 0
  %269 = vperm.xlu0 %268, %v59
  %v270 = vpop.permute.xlu0 %269
  %v276 = vunpack.c.l.b16 %v248
  %v277 = vunpack.c.l.b16 %v249
  %v278 = vunpack.c.l.b16 %v250
  %v279 = vunpack.c.l.b16 %v251
  %v280 = vpack.c.b16 %v277, %v276
  %v281 = vpack.c.b16 %v279, %v278
  %vm282 = vcmask 523264
  %v284 = vsel %vm282, %v280, 0
  %v287 = vsel %vm282, %v281, 0
  %289 = vmatprep.subr.bf16.mxu0 0
  %290 = vmatpush1.bf16.msra.mxu0 0
  %291 = vmatprep.subr.bf16.mxu0 0
  %292 = vmatpush1.bf16.msra.mxu0 0
  %293 = vmatprep.subr.bf16.mxu0 0
  %294 = vmatpush1.bf16.msra.mxu0 0
  %295 = vmatprep.subr.bf16.mxu0 0
  %296 = vmatpush1.bf16.msra.mxu0 0
  %297 = vmatprep.subr.bf16.mxu0 0
  %298 = vmatpush1.bf16.msra.mxu0 %v247
  %299 = vmatprep.subr.bf16.mxu0 0
  %300 = vmatpush1.bf16.msra.mxu0 %v246
  %301 = vmatprep.subr.bf16.mxu0 0
  %302 = vmatpush1.bf16.msra.mxu0 %v245
  %303 = vmatprep.subr.bf16.mxu0 0
  %304 = vmatpush1.bf16.msra.mxu0 %v244
  %305 = vmatprep.subr.bf16.mxu0 0
  %306 = vmatpush2.bf16.msra.mxu0 0
  %307 = vmatprep.subr.bf16.mxu0 0
  %308 = vmatpush2.bf16.msra.mxu0 0
  %309 = vmatprep.subr.bf16.mxu0 0
  %310 = vmatpush2.bf16.msra.mxu0 0
  %311 = vmatprep.subr.bf16.mxu0 0
  %312 = vmatpush2.bf16.msra.mxu0 0
  %313 = vmatprep.subr.bf16.mxu0 0
  %314 = vmatpush2.bf16.msra.mxu0 0
  %315 = vmatprep.subr.bf16.mxu0 0
  %316 = vmatpush2.bf16.msra.mxu0 0
  %317 = vmatprep.subr.bf16.mxu0 0
  %318 = vmatpush2.bf16.msra.mxu0 0
  %319 = vmatprep.subr.bf16.mxu0 0
  %320 = vmatpush2.bf16.msra.mxu0 0
  %321 = vmatprep.mubr.bf16.mxu0 0
  %322 = vmatmul.mubr.bf16.gmra.mxu0 %v284
  %v323 = vpop.f32.mrf.mxu0
  %v324 = vadd.f32 %v255, %v323
  %v325 = vpop.f32.mrf.mxu0
  %v326 = vpop.f32.mrf.mxu0
  %v327 = vadd.f32 %v260, %v326
  %v328 = vpop.f32.mrf.mxu0
  %329 = vmatprep.mubr.bf16.mxu0 0
  %330 = vmatmul.mubr.bf16.gmra.mxu0 %v287
  %v331 = vpop.f32.mrf.mxu0
  %v332 = vadd.f32 %v265, %v331
  %v333 = vpop.f32.mrf.mxu0
  %v334 = vpop.f32.mrf.mxu0
  %v335 = vadd.f32 %v270, %v334
  %v336 = vpop.f32.mrf.mxu0
  %337 = vdwg.mxu0
  %v338 = vmax.f32 %v324, 0.0
  %v339 = vmax.f32 %v327, 0.0
  %v340 = vmax.f32 %v332, 0.0
  %v341 = vmax.f32 %v335, 0.0
  %v342 = vpack.c.bf16 %v339, %v338
  %v343 = vpack.c.bf16 %v341, %v340
  %v344 = vld [vmem:[%s3] sm:$0xf]
  %v345 = vld [vmem:[%s3 + $0x4] sm:$0xf]
  %347 = vset.pattern.permute.xlu0 0
  %348 = vperm.xlu0 %347, %v60
  %v349 = vpop.permute.xlu0 %348
  %352 = vset.pattern.permute.xlu0 0
  %353 = vperm.xlu0 %352, %v61
  %v354 = vpop.permute.xlu0 %353
  %v358 = vunpack.c.l.b16 %v344
  %v359 = vunpack.c.l.b16 %v345
  %v360 = vpack.c.b16 %v359, %v358
  %vm361 = vcmask 261120
  %v363 = vsel %vm361, %v360, 0
  %365 = vmatprep.subr.bf16.mxu0 0
  %366 = vmatpush1.bf16.msra.mxu0 0
  %367 = vmatprep.subr.bf16.mxu0 0
  %368 = vmatpush1.bf16.msra.mxu0 0
  %369 = vmatprep.subr.bf16.mxu0 0
  %370 = vmatpush1.bf16.msra.mxu0 0
  %371 = vmatprep.subr.bf16.mxu0 0
  %372 = vmatpush1.bf16.msra.mxu0 0
  %373 = vmatprep.subr.bf16.mxu0 0
  %374 = vmatpush1.bf16.msra.mxu0 0
  %375 = vmatprep.subr.bf16.mxu0 0
  %376 = vmatpush1.bf16.msra.mxu0 0
  %377 = vmatprep.subr.bf16.mxu0 0
  %378 = vmatpush1.bf16.msra.mxu0 %v343
  %379 = vmatprep.subr.bf16.mxu0 0
  %380 = vmatpush1.bf16.msra.mxu0 %v342
  %381 = vmatprep.subr.bf16.mxu0 0
  %382 = vmatpush2.bf16.msra.mxu0 0
  %383 = vmatprep.subr.bf16.mxu0 0
  %384 = vmatpush2.bf16.msra.mxu0 0
  %385 = vmatprep.subr.bf16.mxu0 0
  %386 = vmatpush2.bf16.msra.mxu0 0
  %387 = vmatprep.subr.bf16.mxu0 0
  %388 = vmatpush2.bf16.msra.mxu0 0
  %389 = vmatprep.subr.bf16.mxu0 0
  %390 = vmatpush2.bf16.msra.mxu0 0
  %391 = vmatprep.subr.bf16.mxu0 0
  %392 = vmatpush2.bf16.msra.mxu0 0
  %393 = vmatprep.subr.bf16.mxu0 0
  %394 = vmatpush2.bf16.msra.mxu0 0
  %395 = vmatprep.subr.bf16.mxu0 0
  %396 = vmatpush2.bf16.msra.mxu0 0
  %397 = vmatprep.mubr.bf16.mxu0 0
  %398 = vmatmul.mubr.bf16.gmra.mxu0 %v363
  %v399 = vpop.f32.mrf.mxu0
  %v400 = vadd.f32 %v349, %v399
  %v401 = vpop.f32.mrf.mxu0
  %v402 = vpop.f32.mrf.mxu0
  %v403 = vadd.f32 %v354, %v402
  %v404 = vpop.f32.mrf.mxu0
  %405 = vdwg.mxu0
  %v406 = vmax.f32 %v400, 0.0
  %v407 = vmax.f32 %v403, 0.0
  %409 = vset.pattern.permute.xlu0 0
  %410 = vperm.xlu0 %409, %v62
  %v411 = vpop.permute.xlu0 %410
  %414 = vset.pattern.permute.xlu0 0
  %415 = vperm.xlu0 %414, %v65
  %v416 = vpop.permute.xlu0 %415
  %v418 = vlaneseq
  %v419 = vshrl.u32 %v418, 7
  %v420 = vsub.s32 0, %v419
  %v421 = vrot.slane %v406, %v420
  %v422 = vmul.f32 %v416, %v421
  %v423 = vadd.f32 %v411, %v422
  %424 = vset.pattern.permute.xlu0 1
  %425 = vperm.xlu0 %424, %v65
  %v426 = vpop.permute.xlu0 %425
  %v428 = vlaneseq
  %v429 = vshrl.u32 %v428, 7
  %v430 = vsub.s32 1, %v429
  %v431 = vrot.slane %v406, %v430
  %v432 = vmul.f32 %v426, %v431
  %v433 = vadd.f32 %v423, %v432
  %434 = vset.pattern.permute.xlu0 2
  %435 = vperm.xlu0 %434, %v65
  %v436 = vpop.permute.xlu0 %435
  %v438 = vlaneseq
  %v439 = vshrl.u32 %v438, 7
  %v440 = vsub.s32 2, %v439
  %v441 = vrot.slane %v406, %v440
  %v442 = vmul.f32 %v436, %v441
  %v443 = vadd.f32 %v433, %v442
  %444 = vset.pattern.permute.xlu0 3
  %445 = vperm.xlu0 %444, %v65
  %v446 = vpop.permute.xlu0 %445
  %v448 = vlaneseq
  %v449 = vshrl.u32 %v448, 7
  %v450 = vsub.s32 3, %v449
  %v451 = vrot.slane %v406, %v450
  %v452 = vmul.f32 %v446, %v451
  %v453 = vadd.f32 %v443, %v452
  %454 = vset.pattern.permute.xlu0 4
  %455 = vperm.xlu0 %454, %v65
  %v456 = vpop.permute.xlu0 %455
  %v458 = vlaneseq
  %v459 = vshrl.u32 %v458, 7
  %v460 = vsub.s32 4, %v459
  %v461 = vrot.slane %v406, %v460
  %v462 = vmul.f32 %v456, %v461
  %v463 = vadd.f32 %v453, %v462
  %464 = vset.pattern.permute.xlu0 5
  %465 = vperm.xlu0 %464, %v65
  %v466 = vpop.permute.xlu0 %465
  %v468 = vlaneseq
  %v469 = vshrl.u32 %v468, 7
  %v470 = vsub.s32 5, %v469
  %v471 = vrot.slane %v406, %v470
  %v472 = vmul.f32 %v466, %v471
  %v473 = vadd.f32 %v463, %v472
  %474 = vset.pattern.permute.xlu0 6
  %475 = vperm.xlu0 %474, %v65
  %v476 = vpop.permute.xlu0 %475
  %v478 = vlaneseq
  %v479 = vshrl.u32 %v478, 7
  %v480 = vsub.s32 6, %v479
  %v481 = vrot.slane %v406, %v480
  %v482 = vmul.f32 %v476, %v481
  %v483 = vadd.f32 %v473, %v482
  %484 = vset.pattern.permute.xlu0 7
  %485 = vperm.xlu0 %484, %v65
  %v486 = vpop.permute.xlu0 %485
  %v488 = vlaneseq
  %v489 = vshrl.u32 %v488, 7
  %v490 = vsub.s32 7, %v489
  %v491 = vrot.slane %v406, %v490
  %v492 = vmul.f32 %v486, %v491
  %v493 = vadd.f32 %v483, %v492
  %494 = vset.pattern.permute.xlu0 8
  %495 = vperm.xlu0 %494, %v65
  %v496 = vpop.permute.xlu0 %495
  %v498 = vlaneseq
  %v499 = vshrl.u32 %v498, 7
  %v500 = vsub.s32 0, %v499
  %v501 = vrot.slane %v407, %v500
  %v502 = vmul.f32 %v496, %v501
  %v503 = vadd.f32 %v493, %v502
  %504 = vset.pattern.permute.xlu0 9
  %505 = vperm.xlu0 %504, %v65
  %v506 = vpop.permute.xlu0 %505
  %v508 = vlaneseq
  %v509 = vshrl.u32 %v508, 7
  %v510 = vsub.s32 1, %v509
  %v511 = vrot.slane %v407, %v510
  %v512 = vmul.f32 %v506, %v511
  %v513 = vadd.f32 %v503, %v512
  %514 = vset.pattern.permute.xlu0 10
  %515 = vperm.xlu0 %514, %v65
  %v516 = vpop.permute.xlu0 %515
  %v518 = vlaneseq
  %v519 = vshrl.u32 %v518, 7
  %v520 = vsub.s32 2, %v519
  %v521 = vrot.slane %v407, %v520
  %v522 = vmul.f32 %v516, %v521
  %v523 = vadd.f32 %v513, %v522
  %524 = vset.pattern.permute.xlu0 11
  %525 = vperm.xlu0 %524, %v65
  %v526 = vpop.permute.xlu0 %525
  %v528 = vlaneseq
  %v529 = vshrl.u32 %v528, 7
  %v530 = vsub.s32 3, %v529
  %v531 = vrot.slane %v407, %v530
  %v532 = vmul.f32 %v526, %v531
  %v533 = vadd.f32 %v523, %v532
  %534 = vset.pattern.permute.xlu0 12
  %535 = vperm.xlu0 %534, %v65
  %v536 = vpop.permute.xlu0 %535
  %v538 = vlaneseq
  %v539 = vshrl.u32 %v538, 7
  %v540 = vsub.s32 4, %v539
  %v541 = vrot.slane %v407, %v540
  %v542 = vmul.f32 %v536, %v541
  %v543 = vadd.f32 %v533, %v542
  %544 = vset.pattern.permute.xlu0 13
  %545 = vperm.xlu0 %544, %v65
  %v546 = vpop.permute.xlu0 %545
  %v548 = vlaneseq
  %v549 = vshrl.u32 %v548, 7
  %v550 = vsub.s32 5, %v549
  %v551 = vrot.slane %v407, %v550
  %v552 = vmul.f32 %v546, %v551
  %v553 = vadd.f32 %v543, %v552
  %554 = vset.pattern.permute.xlu0 14
  %555 = vperm.xlu0 %554, %v65
  %v556 = vpop.permute.xlu0 %555
  %v558 = vlaneseq
  %v559 = vshrl.u32 %v558, 7
  %v560 = vsub.s32 6, %v559
  %v561 = vrot.slane %v407, %v560
  %v562 = vmul.f32 %v556, %v561
  %v563 = vadd.f32 %v553, %v562
  %564 = vset.pattern.permute.xlu0 15
  %565 = vperm.xlu0 %564, %v65
  %v566 = vpop.permute.xlu0 %565
  %v568 = vlaneseq
  %v569 = vshrl.u32 %v568, 7
  %v570 = vsub.s32 7, %v569
  %v571 = vrot.slane %v407, %v570
  %v572 = vmul.f32 %v566, %v571
  %v573 = vadd.f32 %v563, %v572
  %v574 = vmax.f32 %v573, 0.0
  %576 = vset.pattern.permute.xlu0 0
  %577 = vperm.xlu0 %576, %v63
  %v578 = vpop.permute.xlu0 %577
  %580 = vset.pattern.permute.xlu0 16
  %581 = vperm.xlu0 %580, %v65
  %v582 = vpop.permute.xlu0 %581
  %v584 = vlaneseq
  %v585 = vshrl.u32 %v584, 7
  %v586 = vsub.s32 0, %v585
  %v587 = vrot.slane %v574, %v586
  %v588 = vmul.f32 %v582, %v587
  %v589 = vadd.f32 %v578, %v588
  %590 = vset.pattern.permute.xlu0 17
  %591 = vperm.xlu0 %590, %v65
  %v592 = vpop.permute.xlu0 %591
  %v594 = vlaneseq
  %v595 = vshrl.u32 %v594, 7
  %v596 = vsub.s32 1, %v595
  %v597 = vrot.slane %v574, %v596
  %v598 = vmul.f32 %v592, %v597
  %v599 = vadd.f32 %v589, %v598
  %600 = vset.pattern.permute.xlu0 18
  %601 = vperm.xlu0 %600, %v65
  %v602 = vpop.permute.xlu0 %601
  %v604 = vlaneseq
  %v605 = vshrl.u32 %v604, 7
  %v606 = vsub.s32 2, %v605
  %v607 = vrot.slane %v574, %v606
  %v608 = vmul.f32 %v602, %v607
  %v609 = vadd.f32 %v599, %v608
  %610 = vset.pattern.permute.xlu0 19
  %611 = vperm.xlu0 %610, %v65
  %v612 = vpop.permute.xlu0 %611
  %v614 = vlaneseq
  %v615 = vshrl.u32 %v614, 7
  %v616 = vsub.s32 3, %v615
  %v617 = vrot.slane %v574, %v616
  %v618 = vmul.f32 %v612, %v617
  %v619 = vadd.f32 %v609, %v618
  %620 = vset.pattern.permute.xlu0 20
  %621 = vperm.xlu0 %620, %v65
  %v622 = vpop.permute.xlu0 %621
  %v624 = vlaneseq
  %v625 = vshrl.u32 %v624, 7
  %v626 = vsub.s32 4, %v625
  %v627 = vrot.slane %v574, %v626
  %v628 = vmul.f32 %v622, %v627
  %v629 = vadd.f32 %v619, %v628
  %630 = vset.pattern.permute.xlu0 21
  %631 = vperm.xlu0 %630, %v65
  %v632 = vpop.permute.xlu0 %631
  %v634 = vlaneseq
  %v635 = vshrl.u32 %v634, 7
  %v636 = vsub.s32 5, %v635
  %v637 = vrot.slane %v574, %v636
  %v638 = vmul.f32 %v632, %v637
  %v639 = vadd.f32 %v629, %v638
  %640 = vset.pattern.permute.xlu0 22
  %641 = vperm.xlu0 %640, %v65
  %v642 = vpop.permute.xlu0 %641
  %v644 = vlaneseq
  %v645 = vshrl.u32 %v644, 7
  %v646 = vsub.s32 6, %v645
  %v647 = vrot.slane %v574, %v646
  %v648 = vmul.f32 %v642, %v647
  %v649 = vadd.f32 %v639, %v648
  %650 = vset.pattern.permute.xlu0 23
  %651 = vperm.xlu0 %650, %v65
  %v652 = vpop.permute.xlu0 %651
  %v654 = vlaneseq
  %v655 = vshrl.u32 %v654, 7
  %v656 = vsub.s32 7, %v655
  %v657 = vrot.slane %v574, %v656
  %v658 = vmul.f32 %v652, %v657
  %v659 = vadd.f32 %v649, %v658
  %v660 = vmax.f32 %v659, 0.0
  %662 = vset.pattern.permute.xlu0 0
  %663 = vperm.xlu0 %662, %v64
  %v664 = vpop.permute.xlu0 %663
  %666 = vset.pattern.permute.xlu0 24
  %667 = vperm.xlu0 %666, %v65
  %v668 = vpop.permute.xlu0 %667
  %v670 = vlaneseq
  %v671 = vshrl.u32 %v670, 7
  %v672 = vsub.s32 0, %v671
  %v673 = vrot.slane %v660, %v672
  %v674 = vmul.f32 %v668, %v673
  %v675 = vadd.f32 %v664, %v674
  %676 = vset.pattern.permute.xlu0 25
  %677 = vperm.xlu0 %676, %v65
  %v678 = vpop.permute.xlu0 %677
  %v680 = vlaneseq
  %v681 = vshrl.u32 %v680, 7
  %v682 = vsub.s32 1, %v681
  %v683 = vrot.slane %v660, %v682
  %v684 = vmul.f32 %v678, %v683
  %v685 = vadd.f32 %v675, %v684
  %686 = vset.pattern.permute.xlu0 26
  %687 = vperm.xlu0 %686, %v65
  %v688 = vpop.permute.xlu0 %687
  %v690 = vlaneseq
  %v691 = vshrl.u32 %v690, 7
  %v692 = vsub.s32 2, %v691
  %v693 = vrot.slane %v660, %v692
  %v694 = vmul.f32 %v688, %v693
  %v695 = vadd.f32 %v685, %v694
  %696 = vset.pattern.permute.xlu0 27
  %697 = vperm.xlu0 %696, %v65
  %v698 = vpop.permute.xlu0 %697
  %v700 = vlaneseq
  %v701 = vshrl.u32 %v700, 7
  %v702 = vsub.s32 3, %v701
  %v703 = vrot.slane %v660, %v702
  %v704 = vmul.f32 %v698, %v703
  %v705 = vadd.f32 %v695, %v704
  %706 = vst [vmem:[%s6] sm:$0x3] %v705
  // Predicated region
  $region26: #{census_net_forward.1} parent=0 // pred_check
    _
  $region27: #{census_net_forward.1} parent=0 // pred_check_branch
    %708 = sbr.rel (0) target = $region29
  $region28: #{census_net_forward.1} parent=0 // pred_region
    _
  $region29: #{census_net_forward.1} parent=0 // pred_fallthru
    _
  // Predicated region
  $region30: #{census_net_forward.1} parent=0 // pred_check
    _
  $region31: #{census_net_forward.1} parent=0 // pred_check_branch
    %710 = sbr.rel (0) target = $region33
  $region32: #{census_net_forward.1} parent=0 // pred_region
    _
  $region33: #{census_net_forward.1} parent=0 // pred_fallthru
    _

</llo_original>
